<compile_context>
chip_gen: v5e
topology: v5e:2x2
jax: 0.10.0
libtpu: 0.0.40
codegen_flags: <defaults>
</compile_context>

<pallas_src>
import jax
import jax.numpy as jnp
from jax.experimental import pallas as pl
from jax.experimental.pallas import tpu as pltpu

K_CURV = 1.0  # Lorentz manifold curvature constant (manifold.k)


def _residual_block_kernel(x_ref, w1_ref, b1_ref, w2t_ref, w2s_ref, b2_ref, o_ref):
    # x_ref: (TM, 1+D) full Lorentz points (col 0 = time, cols 1: = space).
    x_full = x_ref[...]                                                     # io dtype

    # ---- fc1 : LorentzHypLinear ---------------------------------------------
    # Time row of w1 is folded into the MXU matmul (K = 1+D); its time output
    # is discarded by the following HypActivation, which recomputes time.
    s1 = jnp.dot(x_full, w1_ref[...],
                 preferred_element_type=jnp.float32) + b1_ref[...]          # (TM, D) f32

    # ---- HypActivation(relu) --------------------------------------------------
    s1a = jnp.maximum(s1, 0.0)
    t1a = jnp.sqrt(jnp.sum(s1a * s1a, axis=-1, keepdims=True) + K_CURV)     # (TM, 1)

    # ---- fc2 : LorentzHypLinear -----------------------------------------------
    # t1a is produced in-kernel, so w2 stays split: time row via broadcasted
    # VPU multiply-add (free filler under the memory bound), space rows on MXU.
    s2 = (t1a * w2t_ref[...]
          + jnp.dot(s1a.astype(w2s_ref.dtype), w2s_ref[...],
                    preferred_element_type=jnp.float32)
          + b2_ref[...])                                                    # (TM, D) f32

    # ---- residual add + HypActivation(relu) -----------------------------------
    # Reuse the already-loaded tile value for the residual (no second ref read).
    # Only the space sum matters: the final HypActivation discards the summed
    # time coordinate and recomputes it from the activated space.
    xs = x_full[:, 1:].astype(jnp.float32)                                  # (TM, D)
    rsa = jnp.maximum(s2 + xs, 0.0)
    rt = jnp.sqrt(jnp.sum(rsa * rsa, axis=-1, keepdims=True) + K_CURV)      # (TM, 1)

    # Single lane-dense full-width store: time in column 0, space in columns 1:.
    o_ref[...] = jnp.concatenate([rt, rsa], axis=-1).astype(o_ref.dtype)


def residual_block(x, w1, b1, w2, b2, *, io_dtype=jnp.float32, out_dtype=None,
                   tm=8192, min_steps=4):
    """ResidualBlock forward.

    x: (N, 1+D) Lorentz points; w1, w2: (1+D, D) (in x out, i.e. transposed
    nn.Linear weights); b1, b2: (D,).
    io_dtype: storage dtype of x / weights fed to the MXU (bf16 halves HBM read
    traffic on v6e/v7x); out_dtype: storage dtype of the output (defaults to
    io_dtype; out_dtype=bf16 with io_dtype=f32 is the v5e mixed mode).
    Returns (N, 1+D), dtype == out_dtype.
    """
    n, dl = x.shape
    d = dl - 1
    assert w1.shape == (dl, d) and w2.shape == (dl, d)
    assert b1.shape == (d,) and b2.shape == (d,)

    io_dtype = jnp.dtype(io_dtype)
    out_dtype = io_dtype if out_dtype is None else jnp.dtype(out_dtype)

    x_io = x.astype(io_dtype)
    w1_io = w1.astype(io_dtype)                       # (1+D, D) streamed to MXU
    w2t = w2[0:1, :].astype(jnp.float32)              # time row of w2 (tiny, f32)
    w2s_io = w2[1:, :].astype(io_dtype)               # space rows of w2
    b1_f = b1.reshape(1, d).astype(jnp.float32)
    b2_f = b2.reshape(1, d).astype(jnp.float32)

    # Tile selection: the kernel is HBM-bound, so use the biggest tile that
    # still leaves >= min_steps grid steps (pipeline overlap + megacore work on
    # v7x). Tiny N -> single full-array block.
    if n <= tm:
        tm_eff = n
    else:
        tm_eff = min(tm, max(512, pl.cdiv(n, min_steps)))
        tm_eff = max(8, (tm_eff // 8) * 8)            # keep (8,128) sublane rule
    grid = (pl.cdiv(n, tm_eff),)

    # Advisory cost estimate (lets XLA overlap neighbouring ops).
    itm_x = io_dtype.itemsize
    itm_o = out_dtype.itemsize
    flops = n * (2 * dl * d + 2 * d * d + 2 * d + 4 * d + 2)
    bytes_accessed = (n * dl * (itm_x + itm_o)
                      + (dl * d + d * d) * itm_x + 4 * d * 4)
    cost = pl.CostEstimate(flops=flops, bytes_accessed=bytes_accessed,
                           transcendentals=2 * n)

    # Raise scoped-VMEM limit only if very large tiles are requested (mainly a
    # v5e concern: 16 MiB scoped default); defaults fit comfortably otherwise.
    vmem_need = 2 * tm_eff * dl * (itm_x + itm_o) + (dl * d + d * d) * itm_x + 16 * d * 4
    cp_kwargs = dict(dimension_semantics=("parallel",))
    if vmem_need > (12 << 20):
        cp_kwargs["vmem_limit_bytes"] = min(int(vmem_need * 2), 48 << 20)

    const = lambda i: (0, 0)   # weights/biases: resident in VMEM (loaded once)
    return pl.pallas_call(
        _residual_block_kernel,
        out_shape=jax.ShapeDtypeStruct((n, dl), out_dtype),
        grid_spec=pltpu.PrefetchScalarGridSpec(
            num_scalar_prefetch=0,
            grid=grid,
            in_specs=[
                pl.BlockSpec((tm_eff, dl), lambda i: (i, 0)),  # x tiles (streamed)
                pl.BlockSpec((dl, d), const),                  # w1 (incl. time row)
                pl.BlockSpec((1, d), const),                   # b1
                pl.BlockSpec((1, d), const),                   # w2 time row
                pl.BlockSpec((d, d), const),                   # w2 space rows
                pl.BlockSpec((1, d), const),                   # b2
            ],
            out_specs=pl.BlockSpec((tm_eff, dl), lambda i: (i, 0)),
        ),
        compiler_params=pltpu.CompilerParams(**cp_kwargs),
        cost_estimate=cost,
    )(x_io, w1_io, b1_f, w2t, w2s_io, b2_f)


def residual_block_ref(x, w1, b1, w2, b2):
    """Pure-JAX reference (mirrors the PyTorch module semantics)."""
    def hyp_linear(z, w, b):
        s = z @ w + b
        t = jnp.sqrt(jnp.sum(s * s, axis=-1, keepdims=True) + K_CURV)
        return jnp.concatenate([t, s], axis=-1)

    def hyp_relu(z):
        s = jnp.maximum(z[:, 1:], 0.0)
        t = jnp.sqrt(jnp.sum(s * s, axis=-1, keepdims=True) + K_CURV)
        return jnp.concatenate([t, s], axis=-1)

    identity = x
    out = hyp_relu(hyp_linear(x, w1, b1))
    out = hyp_linear(out, w2, b2)
    return hyp_relu(out + identity)


def _make_inputs(batch, hidden_dim, key):
    k_xs, k_w1, k_b1, k_w2, k_b2 = jax.random.split(key, 5)
    # Input on the Lorentz manifold: time = sqrt(||space||^2 + k).
    xs = jax.random.normal(k_xs, (batch, hidden_dim), dtype=jnp.float32)
    xt = jnp.sqrt(jnp.sum(xs * xs, axis=-1, keepdims=True) + K_CURV)
    x = jnp.concatenate([xt, xs], axis=-1)             # (batch, 1 + hidden_dim)
    # nn.Linear(hidden_dim + 1, hidden_dim) parameters (deterministic init).
    bound = 1.0 / jnp.sqrt(jnp.float32(hidden_dim + 1))
    w1 = jax.random.uniform(k_w1, (hidden_dim + 1, hidden_dim),
                            minval=-bound, maxval=bound, dtype=jnp.float32)
    b1 = jax.random.uniform(k_b1, (hidden_dim,),
                            minval=-bound, maxval=bound, dtype=jnp.float32)
    w2 = jax.random.uniform(k_w2, (hidden_dim + 1, hidden_dim),
                            minval=-bound, maxval=bound, dtype=jnp.float32)
    b2 = jax.random.uniform(k_b2, (hidden_dim,),
                            minval=-bound, maxval=bound, dtype=jnp.float32)
    return x, w1, b1, w2, b2


if __name__ == "__main__":
    hidden_dim = 32
    batch = 8

    x, w1, b1, w2, b2 = _make_inputs(batch, hidden_dim, jax.random.PRNGKey(0))
    ref = jax.block_until_ready(residual_block_ref(x, w1, b1, w2, b2))

    # f32 I/O path: tight tolerance vs reference.
    out = jax.block_until_ready(residual_block(x, w1, b1, w2, b2))
    assert out.shape == x.shape and out.dtype == jnp.float32
    assert jnp.allclose(out, ref, atol=1e-4, rtol=1e-4), "f32 mismatch vs reference"

    # bf16 I/O path (halves HBM traffic on v6e/v7x): relaxed tolerance.
    out_bf16 = jax.block_until_ready(
        residual_block(x, w1, b1, w2, b2, io_dtype=jnp.bfloat16))
    assert out_bf16.shape == x.shape and out_bf16.dtype == jnp.bfloat16
    assert jnp.allclose(out_bf16.astype(jnp.float32), ref, atol=1e-1, rtol=1e-1), \
        "bf16 mismatch vs reference"

    # Mixed mode (v5e recommendation): f32 residual read, bf16 output store.
    out_mixed = jax.block_until_ready(
        residual_block(x, w1, b1, w2, b2, out_dtype=jnp.bfloat16))
    assert out_mixed.shape == x.shape and out_mixed.dtype == jnp.bfloat16
    assert jnp.allclose(out_mixed.astype(jnp.float32), ref, atol=3e-2, rtol=3e-2), \
        "mixed-precision mismatch vs reference"

    # Multi-block grid path (forces tm < N, including a padded tail block).
    xg, w1g, b1g, w2g, b2g = _make_inputs(40, hidden_dim, jax.random.PRNGKey(0))
    refg = jax.block_until_ready(residual_block_ref(xg, w1g, b1g, w2g, b2g))
    outg = jax.block_until_ready(
        residual_block(xg, w1g, b1g, w2g, b2g, tm=16, min_steps=2))
    assert outg.shape == xg.shape
    assert jnp.allclose(outg, refg, atol=1e-4, rtol=1e-4), "tiled-grid mismatch"

    print("KERNEL_OK")
</pallas_src>

<mosaic_0001>
module attributes {stable_mosaic.version = 11 : i64} {
  func.func @_residual_block_kernel(%arg0: i32, %arg1: memref<8x33xf32, #tpu.memory_space<vmem>>, %arg2: memref<33x32xf32, #tpu.memory_space<vmem>>, %arg3: memref<1x32xf32, #tpu.memory_space<vmem>>, %arg4: memref<1x32xf32, #tpu.memory_space<vmem>>, %arg5: memref<32x32xf32, #tpu.memory_space<vmem>>, %arg6: memref<1x32xf32, #tpu.memory_space<vmem>>, %arg7: memref<8x33xf32, #tpu.memory_space<vmem>>) attributes {dimension_semantics = [#tpu.dimension_semantics<parallel>], iteration_bounds = array<i64: 1>, scalar_prefetch = 0 : i64, scratch_operands = 0 : i64, tpu.core_type = #tpu.core_type<tc>, window_params = [{transform_indices = @transform_0, window_bounds = array<i64: 8, 33>}, {pipeline_mode = #tpu.pipeline_mode<synchronous>, transform_indices = @transform_1, window_bounds = array<i64: 33, 32>}, {pipeline_mode = #tpu.pipeline_mode<synchronous>, transform_indices = @transform_2, window_bounds = array<i64: 1, 32>}, {pipeline_mode = #tpu.pipeline_mode<synchronous>, transform_indices = @transform_3, window_bounds = array<i64: 1, 32>}, {pipeline_mode = #tpu.pipeline_mode<synchronous>, transform_indices = @transform_4, window_bounds = array<i64: 32, 32>}, {pipeline_mode = #tpu.pipeline_mode<synchronous>, transform_indices = @transform_5, window_bounds = array<i64: 1, 32>}, {transform_indices = @transform_6, window_bounds = array<i64: 8, 33>}]} {
    %c0 = arith.constant 0 : index
    %c0_0 = arith.constant 0 : index
    %0 = vector.load %arg1[%c0, %c0_0] : memref<8x33xf32, #tpu.memory_space<vmem>>, vector<8x33xf32>
    %c0_1 = arith.constant 0 : index
    %c0_2 = arith.constant 0 : index
    %1 = vector.load %arg2[%c0_1, %c0_2] : memref<33x32xf32, #tpu.memory_space<vmem>>, vector<33x32xf32>
    %cst = arith.constant dense<0.000000e+00> : vector<8x32xf32>
    %2 = tpu.matmul %0, %1, %cst {dimension_numbers = #tpu.dot_dimension_numbers<[1], [0], [0], [1], [0, 0, 1, 1], [], []>} : vector<8x33xf32>, vector<33x32xf32>, vector<8x32xf32> -> vector<8x32xf32>
    %c0_3 = arith.constant 0 : index
    %c0_4 = arith.constant 0 : index
    %3 = vector.load %arg3[%c0_3, %c0_4] : memref<1x32xf32, #tpu.memory_space<vmem>>, vector<1x32xf32>
    %4 = vector.broadcast %3 : vector<1x32xf32> to vector<8x32xf32>
    %5 = arith.addf %2, %4 : vector<8x32xf32>
    %cst_5 = arith.constant 0.000000e+00 : f32
    %6 = vector.broadcast %cst_5 : f32 to vector<8x32xf32>
    %7 = arith.maximumf %5, %6 : vector<8x32xf32>
    %8 = arith.mulf %7, %7 : vector<8x32xf32>
    %cst_6 = arith.constant dense<0.000000e+00> : vector<8xf32>
    %9 = vector.multi_reduction <add>, %8, %cst_6 [1] : vector<8x32xf32> to vector<8xf32>
    %10 = vector.shape_cast %9 : vector<8xf32> to vector<8x1xf32>
    %cst_7 = arith.constant 1.000000e+00 : f32
    %11 = vector.broadcast %cst_7 : f32 to vector<8x1xf32>
    %12 = arith.addf %10, %11 : vector<8x1xf32>
    %13 = math.sqrt %12 : vector<8x1xf32>
    %c0_8 = arith.constant 0 : index
    %c0_9 = arith.constant 0 : index
    %14 = vector.load %arg4[%c0_8, %c0_9] : memref<1x32xf32, #tpu.memory_space<vmem>>, vector<1x32xf32>
    %15 = vector.broadcast %13 : vector<8x1xf32> to vector<8x32xf32>
    %16 = vector.broadcast %14 : vector<1x32xf32> to vector<8x32xf32>
    %17 = arith.mulf %15, %16 : vector<8x32xf32>
    %c0_10 = arith.constant 0 : index
    %c0_11 = arith.constant 0 : index
    %18 = vector.load %arg5[%c0_10, %c0_11] : memref<32x32xf32, #tpu.memory_space<vmem>>, vector<32x32xf32>
    %cst_12 = arith.constant dense<0.000000e+00> : vector<8x32xf32>
    %19 = tpu.matmul %7, %18, %cst_12 {dimension_numbers = #tpu.dot_dimension_numbers<[1], [0], [0], [1], [0, 0, 1, 1], [], []>} : vector<8x32xf32>, vector<32x32xf32>, vector<8x32xf32> -> vector<8x32xf32>
    %20 = arith.addf %17, %19 : vector<8x32xf32>
    %c0_13 = arith.constant 0 : index
    %c0_14 = arith.constant 0 : index
    %21 = vector.load %arg6[%c0_13, %c0_14] : memref<1x32xf32, #tpu.memory_space<vmem>>, vector<1x32xf32>
    %22 = vector.broadcast %21 : vector<1x32xf32> to vector<8x32xf32>
    %23 = arith.addf %20, %22 : vector<8x32xf32>
    %24 = vector.extract_strided_slice %0 {offsets = [0, 1], sizes = [8, 32], strides = [1, 1]} : vector<8x33xf32> to vector<8x32xf32>
    %25 = arith.addf %23, %24 : vector<8x32xf32>
    %cst_15 = arith.constant 0.000000e+00 : f32
    %26 = vector.broadcast %cst_15 : f32 to vector<8x32xf32>
    %27 = arith.maximumf %25, %26 : vector<8x32xf32>
    %28 = arith.mulf %27, %27 : vector<8x32xf32>
    %cst_16 = arith.constant dense<0.000000e+00> : vector<8xf32>
    %29 = vector.multi_reduction <add>, %28, %cst_16 [1] : vector<8x32xf32> to vector<8xf32>
    %30 = vector.shape_cast %29 : vector<8xf32> to vector<8x1xf32>
    %cst_17 = arith.constant 1.000000e+00 : f32
    %31 = vector.broadcast %cst_17 : f32 to vector<8x1xf32>
    %32 = arith.addf %30, %31 : vector<8x1xf32>
    %33 = math.sqrt %32 : vector<8x1xf32>
    %34 = tpu.concatenate %33, %27 in 1 : vector<8x1xf32>, vector<8x32xf32> -> vector<8x33xf32>
    %c0_18 = arith.constant 0 : index
    %c0_19 = arith.constant 0 : index
    %35 = vector.load %arg7[%c0_18, %c0_19] : memref<8x33xf32, #tpu.memory_space<vmem>>, vector<8x33xf32>
    tpu.vector_store %arg7[%c0_18, %c0_19], %34 {strides = array<i32>} : memref<8x33xf32, #tpu.memory_space<vmem>>, vector<8x33xf32>,
    return
  }
  func.func @transform_0(%arg0: i32) -> (i32, i32) {
    %c0_i32 = arith.constant 0 : i32
    %c0_i32_0 = arith.constant 0 : i32
    return %arg0, %c0_i32 : i32, i32
  }
  func.func @transform_1(%arg0: i32) -> (i32, i32) {
    %c0_i32 = arith.constant 0 : i32
    %c0_i32_0 = arith.constant 0 : i32
    %c0_i32_1 = arith.constant 0 : i32
    return %c0_i32, %c0_i32_0 : i32, i32
  }
  func.func @transform_2(%arg0: i32) -> (i32, i32) {
    %c0_i32 = arith.constant 0 : i32
    %c0_i32_0 = arith.constant 0 : i32
    %c0_i32_1 = arith.constant 0 : i32
    return %c0_i32, %c0_i32_0 : i32, i32
  }
  func.func @transform_3(%arg0: i32) -> (i32, i32) {
    %c0_i32 = arith.constant 0 : i32
    %c0_i32_0 = arith.constant 0 : i32
    %c0_i32_1 = arith.constant 0 : i32
    return %c0_i32, %c0_i32_0 : i32, i32
  }
  func.func @transform_4(%arg0: i32) -> (i32, i32) {
    %c0_i32 = arith.constant 0 : i32
    %c0_i32_0 = arith.constant 0 : i32
    %c0_i32_1 = arith.constant 0 : i32
    return %c0_i32, %c0_i32_0 : i32, i32
  }
  func.func @transform_5(%arg0: i32) -> (i32, i32) {
    %c0_i32 = arith.constant 0 : i32
    %c0_i32_0 = arith.constant 0 : i32
    %c0_i32_1 = arith.constant 0 : i32
    return %c0_i32, %c0_i32_0 : i32, i32
  }
  func.func @transform_6(%arg0: i32) -> (i32, i32) {
    %c0_i32 = arith.constant 0 : i32
    %c0_i32_0 = arith.constant 0 : i32
    return %arg0, %c0_i32 : i32, i32
  }
}

</mosaic_0001>

<llo_original>
// kernel: tpu_custom_call.1
$region0: #{tpu_custom_call.1}
  #allocation0 [shape = 'u32[]', space=smem, size = 0x4, offset = 0x4, fixed_abs, tag = 'smem constant byte address 0x4 - core index']
  #allocation1 [shape = 'u32[72,128]{1,0:T(1,128)}', space=vmem, size = 0x9000, scoped, tag = 'internal scratch']
  %s0 = inlined_call_operand.vmem [shape: f32[8,33], index: 0, kind: input, shape index: {}]
  %s1 = inlined_call_operand.vmem [shape: f32[33,32], index: 1, kind: input, shape index: {}]
  %s2 = inlined_call_operand.vmem [shape: f32[1,32], index: 2, kind: input, shape index: {}]
  %s3 = inlined_call_operand.vmem [shape: f32[1,32], index: 3, kind: input, shape index: {}]
  %s4 = inlined_call_operand.vmem [shape: f32[32,32], index: 4, kind: input, shape index: {}]
  %s5 = inlined_call_operand.vmem [shape: f32[1,32], index: 5, kind: input, shape index: {}]
  %s6 = inlined_call_operand.hbm [shape: f32[8,33], index: 6, kind: output, shape index: {}]
  %s7 = sld [smem:[#allocation0]]
  $region34: #{tpu_custom_call.1} parent=0
    _
  %s9 = ssub.s32 1, %s7
  %s10 = scalar_select 0, %s9, %s7
  $region1: #{tpu_custom_call.1} parent=0
    #allocation2 [shape = 'u8[4096]{0}', space=vmem, size = 0x1000, scoped, tag = 'output window, operand 0, single buffered']
    #allocation3 [shape = 's32[1]{0}', space=sflag, size = 0x4, scoped, tag = 'scoped memory for tpu_custom_call.1']
    %11 = vsyncpa [#allocation3], 0
    // Predicated region
    $region2: #{tpu_custom_call.1} parent=1 // pred_check
      _
    $region3: #{tpu_custom_call.1} parent=1 // pred_check_branch
      %13 = sbr.rel (0) target = $region5
    $region4: #{tpu_custom_call.1} parent=1 // pred_region
      _
    $region5: #{tpu_custom_call.1} parent=1 // pred_fallthru
      _
    // Predicated region
    $region6: #{tpu_custom_call.1} parent=1 // pred_check
      _
    $region7: #{tpu_custom_call.1} parent=1 // pred_check_branch
      %15 = sbr.rel (0) target = $region9
    $region8: #{tpu_custom_call.1} parent=1 // pred_region
      _
    $region9: #{tpu_custom_call.1} parent=1 // pred_fallthru
      _
    // Predicated region
    $region10: #{tpu_custom_call.1} parent=1 // pred_check
      _
    $region11: #{tpu_custom_call.1} parent=1 // pred_check_branch
      %17 = sbr.rel (0) target = $region13
    $region12: #{tpu_custom_call.1} parent=1 // pred_region
      _
    $region13: #{tpu_custom_call.1} parent=1 // pred_fallthru
      _
    // Predicated region
    $region14: #{tpu_custom_call.1} parent=1 // pred_check
      _
    $region15: #{tpu_custom_call.1} parent=1 // pred_check_branch
      %19 = sbr.rel (0) target = $region17
    $region16: #{tpu_custom_call.1} parent=1 // pred_region
      _
    $region17: #{tpu_custom_call.1} parent=1 // pred_fallthru
      _
    // Predicated region
    $region18: #{tpu_custom_call.1} parent=1 // pred_check
      _
    $region19: #{tpu_custom_call.1} parent=1 // pred_check_branch
      %21 = sbr.rel (0) target = $region21
    $region20: #{tpu_custom_call.1} parent=1 // pred_region
      _
    $region21: #{tpu_custom_call.1} parent=1 // pred_fallthru
      _
    // Predicated region
    $region22: #{tpu_custom_call.1} parent=1 // pred_check
      _
    $region23: #{tpu_custom_call.1} parent=1 // pred_check_branch
      %23 = sbr.rel (0) target = $region25
    $region24: #{tpu_custom_call.1} parent=1 // pred_region
      _
    $region25: #{tpu_custom_call.1} parent=1 // pred_fallthru
      _
    %v24 = vld [vmem:[%s0] sm:$0xff]
    %v25 = vld [vmem:[%s1] sm:$0xff]
    %v26 = vld [vmem:[%s1 + $0x8] sm:$0xff]
    %v27 = vld [vmem:[%s1 + $0x10] sm:$0xff]
    %v28 = vld [vmem:[%s1 + $0x18] sm:$0xff]
    %v29 = vld [vmem:[%s1 + $0x20] sm:$0x1]
    %v30 = vld [vmem:[%s2] sm:$0x1]
    %v32 = vperm.slane %v30, 0
    %vm34 = vcmask 269312
    %v36 = vsel %vm34, %v24, 0
    %vm38 = vcmask 1040384
    %v40 = vsel %vm38, %v29, 0
    %42 = vmatpush.msra.mxu0 0.0
    %43 = vmatpush.msra.mxu0 0.0
    %44 = vmatpush.msra.mxu0 0.0
    %45 = vmatpush.msra.mxu0 0.0
    %46 = vmatpush.msra.mxu0 0.0
    %47 = vmatpush.msra.mxu0 0.0
    %48 = vmatpush.msra.mxu0 0.0
    %49 = vmatpush.msra.mxu0 0.0
    %50 = vmatpush.msra.mxu0 0.0
    %51 = vmatpush.msra.mxu0 0.0
    %52 = vmatpush.msra.mxu0 0.0
    %53 = vmatpush.msra.mxu0 %v40
    %54 = vmatpush.msra.mxu0 %v28
    %55 = vmatpush.msra.mxu0 %v27
    %56 = vmatpush.msra.mxu0 %v26
    %57 = vmatpush.msra.mxu0 %v25
    %58 = vmatmul.f32.gmra.mxu0 %v36
    %v59 = vpop.f32.mrf.mxu0
    %v60 = vadd.f32 %v32, %v59
    %61 = vdwg.mxu0
    %v62 = vmax.f32 %v60, 0.0
    %v63 = vmul.f32 %v62, %v62
    %vm64 = vcmask 261120
    %v65 = vsel %vm64, %v63, 0.0
    %66 = vadd.xlane.f32.xlu0 %v65
    %v67 = vpop.xlane.xlu0 %66
    %v68 = vadd.f32 %v67, 1.0
    %v69 = vrsqrt.pop %v68
    %v70 = vmul.f32 %v69, %v68
    %v71 = vmul.f32 %v70, %v69
    %v72 = vmul.f32 0.5, %v71
    %v73 = vsub.f32 1.5, %v72
    %v74 = vmul.f32 %v69, %v73
    %v75 = vmul.f32 %v68, %v74
    %vm76 = vcmp.eq.f32.partialorder %v68, inf
    %v77 = vsel %vm76, %v68, %v75
    %vm78 = vcmp.eq.f32.partialorder %v68, 0.0
    %v79 = vand.u32 %v68, 2147483648
    %v80 = vsel %vm78, %v79, %v77
    %v81 = vld [vmem:[%s3] sm:$0x1]
    %v83 = vperm.slane %v81, 0
    %v85 = vmul.f32 %v80, %v83
    %v86 = vld [vmem:[%s4] sm:$0xff]
    %v87 = vld [vmem:[%s4 + $0x8] sm:$0xff]
    %v88 = vld [vmem:[%s4 + $0x10] sm:$0xff]
    %v89 = vld [vmem:[%s4 + $0x18] sm:$0xff]
    %v91 = vsel %vm64, %v62, 0
    %93 = vmatpush.msra.mxu0 0.0
    %94 = vmatpush.msra.mxu0 0.0
    %95 = vmatpush.msra.mxu0 0.0
    %96 = vmatpush.msra.mxu0 0.0
    %97 = vmatpush.msra.mxu0 0.0
    %98 = vmatpush.msra.mxu0 0.0
    %99 = vmatpush.msra.mxu0 0.0
    %100 = vmatpush.msra.mxu0 0.0
    %101 = vmatpush.msra.mxu0 0.0
    %102 = vmatpush.msra.mxu0 0.0
    %103 = vmatpush.msra.mxu0 0.0
    %104 = vmatpush.msra.mxu0 0.0
    %105 = vmatpush.msra.mxu0 %v89
    %106 = vmatpush.msra.mxu0 %v88
    %107 = vmatpush.msra.mxu0 %v87
    %108 = vmatpush.msra.mxu0 %v86
    %109 = vmatmul.f32.gmra.mxu0 %v91
    %v110 = vpop.f32.mrf.mxu0
    %v111 = vadd.f32 0.0, %v110
    %112 = vdwg.mxu0
    %v113 = vadd.f32 %v85, %v111
    %v114 = vld [vmem:[%s5] sm:$0x1]
    %v116 = vperm.slane %v114, 0
    %v118 = vadd.f32 %v113, %v116
    %119 = vrot.lane.b32.xlu0 %v24, 127
    %v120 = vpop.permute.xlu0 %119
    %v122 = vadd.f32 %v118, %v120
    %v123 = vmax.f32 %v122, 0.0
    %v124 = vmul.f32 %v123, %v123
    %v125 = vsel %vm64, %v124, 0.0
    %126 = vadd.xlane.f32.xlu0 %v125
    %v127 = vpop.xlane.xlu0 %126
    %v128 = vadd.f32 %v127, 1.0
    %v129 = vrsqrt.pop %v128
    %v130 = vmul.f32 %v129, %v128
    %v131 = vmul.f32 %v130, %v129
    %v132 = vmul.f32 0.5, %v131
    %v133 = vsub.f32 1.5, %v132
    %v134 = vmul.f32 %v129, %v133
    %v135 = vmul.f32 %v128, %v134
    %vm136 = vcmp.eq.f32.partialorder %v128, inf
    %v137 = vsel %vm136, %v128, %v135
    %vm138 = vcmp.eq.f32.partialorder %v128, 0.0
    %v139 = vand.u32 %v128, 2147483648
    %v140 = vsel %vm138, %v139, %v137
    %142 = vrot.lane.b32.xlu0 %v123, 1
    %v143 = vpop.permute.xlu0 %142
    %vm145 = vcmask 7168
    %v146 = vsel %vm145, %v140, %v143
    %147 = vst.msk [vmem:[#allocation2] sm:$0xff] %vm34, %v146
    // Predicated region
    $region26: #{tpu_custom_call.1} parent=1 // pred_check
      _
    $region27: #{tpu_custom_call.1} parent=1 // pred_check_branch
      %149 = sbr.rel (0) target = $region29
    $region28: #{tpu_custom_call.1} parent=1 // pred_region
      %151 = vsyncadd [#allocation3], 0
      %s153 = sshll.u32 [#allocation2], 4
      %s154 = int_to_ptr.vmem [resolvable:$true] %s153
      %s155 = sshll.u32 %s6, 4
      %s156 = int_to_ptr.hbm [resolvable:$true] %s155
      %158 = dma.vmem_to_hbm [thread:$0]  %s154, 128, %s156, [#allocation3]
    $region29: #{tpu_custom_call.1} parent=1 // pred_fallthru
      _
    // Predicated region
    $region30: #{tpu_custom_call.1} parent=1 // pred_check
      _
    $region31: #{tpu_custom_call.1} parent=1 // pred_check_branch
      %160 = sbr.rel (0) target = $region33
    $region32: #{tpu_custom_call.1} parent=1 // pred_region
      %162 = dma.done [#allocation3], 128
    $region33: #{tpu_custom_call.1} parent=1 // pred_fallthru
      _
    %163 = vsyncpa [#allocation3], 1

</llo_original>
